<compile_context>
chip_gen: v7x
topology: tpu7x:2x2x1
jax: 0.10.0
libtpu: 0.0.40
codegen_flags: <defaults>
</compile_context>

<pallas_src>
import jax
import jax.numpy as jnp
from jax.experimental import pallas as pl
from jax.experimental.pallas import tpu as pltpu


def _mlp_kernel(x_ref, w1_ref, b1_ref, w2_ref, b2_ref, o_ref):
    # Layer 1: bf16 x @ bf16 W1 -> f32 accumulation on the MXU.
    h = jnp.dot(x_ref[...], w1_ref[...], preferred_element_type=jnp.float32)
    # Bias + ReLU epilogue in f32 on the VPU (v5e has no bf16 VPU path).
    h = jnp.maximum(h + b1_ref[...], 0.0)
    # Layer 2: re-cast activations to bf16 for the MXU, accumulate in f32.
    o = jnp.dot(h.astype(jnp.bfloat16), w2_ref[...],
                preferred_element_type=jnp.float32)
    o_ref[...] = (o + b2_ref[...]).astype(o_ref.dtype)


def _round_up(n, m):
    return ((n + m - 1) // m) * m


def _choose_tile(b):
    """Pick a batch tile: big enough to fill the MXU, >=2 grid steps when possible."""
    b8 = _round_up(b, 8)
    if b8 >= 512:
        return 256                      # near-full MXU rows, >=2 grid steps
    if b8 >= 16:
        return _round_up(b8 // 2, 8)    # split small batches into 2 tiles (v7x TCs)
    return b8                           # tiny batch: single tile


@jax.jit
def dense_classifier_forward(x, w1, b1, w2, b2):
    B, Din = x.shape
    H = w1.shape[1]
    C = w2.shape[1]

    tm = _choose_tile(B)
    B_pad = _round_up(B, tm)
    C_pad = _round_up(max(C, 128), 128)   # lane-dense output slab

    # Wrapper-side layout plumbing: pad batch rows, pad classes to 128 lanes,
    # cast matmul operands to bf16 (halves DMA bytes + native MXU rate).
    x_p = jnp.zeros((B_pad, Din), jnp.bfloat16).at[:B].set(x.astype(jnp.bfloat16))
    w1_b = w1.astype(jnp.bfloat16)
    b1_p = b1.reshape(1, H).astype(jnp.float32)
    w2_p = jnp.zeros((H, C_pad), jnp.bfloat16).at[:, :C].set(w2.astype(jnp.bfloat16))
    b2_p = jnp.zeros((1, C_pad), jnp.float32).at[:, :C].set(
        b2.reshape(1, C).astype(jnp.float32))

    grid = (B_pad // tm,)
    flops = 2 * B_pad * (Din * H + H * C_pad)
    bytes_accessed = (x_p.size * 2 + w1_b.size * 2 + w2_p.size * 2
                      + b1_p.size * 4 + b2_p.size * 4 + B_pad * C_pad * 4)

    out = pl.pallas_call(
        _mlp_kernel,
        out_shape=jax.ShapeDtypeStruct((B_pad, C_pad), jnp.float32),
        grid=grid,
        in_specs=[
            pl.BlockSpec((tm, Din), lambda i: (i, 0)),    # x tile (bf16)
            pl.BlockSpec((Din, H), lambda i: (0, 0)),     # W1, resident (bf16)
            pl.BlockSpec((1, H), lambda i: (0, 0)),       # b1 (f32)
            pl.BlockSpec((H, C_pad), lambda i: (0, 0)),   # W2, lane-padded (bf16)
            pl.BlockSpec((1, C_pad), lambda i: (0, 0)),   # b2, lane-padded (f32)
        ],
        out_specs=pl.BlockSpec((tm, C_pad), lambda i: (i, 0)),
        compiler_params=pltpu.CompilerParams(
            dimension_semantics=("parallel",),
            vmem_limit_bytes=48 * 1024 * 1024,
        ),
        cost_estimate=pl.CostEstimate(
            flops=flops, transcendentals=0, bytes_accessed=bytes_accessed),
    )(x_p, w1_b, b1_p, w2_p, b2_p)

    # Strip batch / class padding.
    return out[:B, :C]


def init_params(key, input_dim=768, hidden_dim=256, n_classes=5):
    # Deterministic synthetic init mimicking nn.Linear's U(-1/sqrt(fan_in), +)
    k1, k2, k3, k4 = jax.random.split(key, 4)
    lim1 = 1.0 / jnp.sqrt(input_dim)
    lim2 = 1.0 / jnp.sqrt(hidden_dim)
    w1 = jax.random.uniform(k1, (input_dim, hidden_dim), jnp.float32, -lim1, lim1)
    b1 = jax.random.uniform(k2, (1, hidden_dim), jnp.float32, -lim1, lim1)
    w2 = jax.random.uniform(k3, (hidden_dim, n_classes), jnp.float32, -lim2, lim2)
    b2 = jax.random.uniform(k4, (1, n_classes), jnp.float32, -lim2, lim2)
    return w1, b1, w2, b2


if __name__ == "__main__":
    key = jax.random.PRNGKey(0)
    kx, kp = jax.random.split(key)

    B, Din, H, C = 8, 768, 256, 5
    x = jax.random.normal(kx, (B, Din), jnp.float32)
    w1, b1, w2, b2 = init_params(kp, Din, H, C)

    out = dense_classifier_forward(x, w1, b1, w2, b2)
    jax.block_until_ready(out)
    assert out.shape == (B, C)

    # Reference in plain JAX with matching bf16 operand rounding + f32 accum
    # (eval-mode dropout == identity).
    xb = x.astype(jnp.bfloat16).astype(jnp.float32)
    w1b = w1.astype(jnp.bfloat16).astype(jnp.float32)
    w2b = w2.astype(jnp.bfloat16).astype(jnp.float32)
    h_ref = jnp.maximum(
        jnp.dot(xb, w1b, precision=jax.lax.Precision.HIGHEST) + b1, 0.0)
    ref = jnp.dot(h_ref.astype(jnp.bfloat16).astype(jnp.float32), w2b,
                  precision=jax.lax.Precision.HIGHEST) + b2

    assert jnp.allclose(out, ref, atol=1e-2, rtol=1e-2), (
        float(jnp.max(jnp.abs(out - ref))))

    print("KERNEL_OK")
</pallas_src>

<mosaic_0001>
module attributes {stable_mosaic.version = 11 : i64} {
  func.func @_mlp_kernel(%arg0: i32, %arg1: memref<8x768xbf16, #tpu.memory_space<vmem>>, %arg2: memref<768x256xbf16, #tpu.memory_space<vmem>>, %arg3: memref<1x256xf32, #tpu.memory_space<vmem>>, %arg4: memref<256x128xbf16, #tpu.memory_space<vmem>>, %arg5: memref<1x128xf32, #tpu.memory_space<vmem>>, %arg6: memref<8x128xf32, #tpu.memory_space<vmem>>) attributes {dimension_semantics = [#tpu.dimension_semantics<parallel>], iteration_bounds = array<i64: 1>, scalar_prefetch = 0 : i64, scratch_operands = 0 : i64, tpu.core_type = #tpu.core_type<tc>, window_params = [{transform_indices = @transform_0, window_bounds = array<i64: 8, 768>}, {pipeline_mode = #tpu.pipeline_mode<synchronous>, transform_indices = @transform_1, window_bounds = array<i64: 768, 256>}, {pipeline_mode = #tpu.pipeline_mode<synchronous>, transform_indices = @transform_2, window_bounds = array<i64: 1, 256>}, {pipeline_mode = #tpu.pipeline_mode<synchronous>, transform_indices = @transform_3, window_bounds = array<i64: 256, 128>}, {pipeline_mode = #tpu.pipeline_mode<synchronous>, transform_indices = @transform_4, window_bounds = array<i64: 1, 128>}, {transform_indices = @transform_5, window_bounds = array<i64: 8, 128>}]} {
    %c0 = arith.constant 0 : index
    %c0_0 = arith.constant 0 : index
    %0 = vector.load %arg1[%c0, %c0_0] : memref<8x768xbf16, #tpu.memory_space<vmem>>, vector<8x768xbf16>
    %c0_1 = arith.constant 0 : index
    %c0_2 = arith.constant 0 : index
    %1 = vector.load %arg2[%c0_1, %c0_2] : memref<768x256xbf16, #tpu.memory_space<vmem>>, vector<768x256xbf16>
    %cst = arith.constant dense<0.000000e+00> : vector<8x256xf32>
    %2 = tpu.matmul %0, %1, %cst {dimension_numbers = #tpu.dot_dimension_numbers<[1], [0], [0], [1], [0, 0, 1, 1], [], []>} : vector<8x768xbf16>, vector<768x256xbf16>, vector<8x256xf32> -> vector<8x256xf32>
    %c0_3 = arith.constant 0 : index
    %c0_4 = arith.constant 0 : index
    %3 = vector.load %arg3[%c0_3, %c0_4] : memref<1x256xf32, #tpu.memory_space<vmem>>, vector<1x256xf32>
    %4 = vector.broadcast %3 : vector<1x256xf32> to vector<8x256xf32>
    %5 = arith.addf %2, %4 : vector<8x256xf32>
    %cst_5 = arith.constant 0.000000e+00 : f32
    %6 = vector.broadcast %cst_5 : f32 to vector<8x256xf32>
    %7 = arith.maximumf %5, %6 : vector<8x256xf32>
    %8 = arith.truncf %7 : vector<8x256xf32> to vector<8x256xbf16>
    %c0_6 = arith.constant 0 : index
    %c0_7 = arith.constant 0 : index
    %9 = vector.load %arg4[%c0_6, %c0_7] : memref<256x128xbf16, #tpu.memory_space<vmem>>, vector<256x128xbf16>
    %cst_8 = arith.constant dense<0.000000e+00> : vector<8x128xf32>
    %10 = tpu.matmul %8, %9, %cst_8 {dimension_numbers = #tpu.dot_dimension_numbers<[1], [0], [0], [1], [0, 0, 1, 1], [], []>} : vector<8x256xbf16>, vector<256x128xbf16>, vector<8x128xf32> -> vector<8x128xf32>
    %c0_9 = arith.constant 0 : index
    %c0_10 = arith.constant 0 : index
    %11 = vector.load %arg5[%c0_9, %c0_10] : memref<1x128xf32, #tpu.memory_space<vmem>>, vector<1x128xf32>
    %12 = vector.broadcast %11 : vector<1x128xf32> to vector<8x128xf32>
    %13 = arith.addf %10, %12 : vector<8x128xf32>
    %c0_11 = arith.constant 0 : index
    %c0_12 = arith.constant 0 : index
    %14 = vector.load %arg6[%c0_11, %c0_12] : memref<8x128xf32, #tpu.memory_space<vmem>>, vector<8x128xf32>
    tpu.vector_store %arg6[%c0_11, %c0_12], %13 {strides = array<i32>} : memref<8x128xf32, #tpu.memory_space<vmem>>, vector<8x128xf32>,
    return
  }
  func.func @transform_0(%arg0: i32) -> (i32, i32) {
    %c0_i32 = arith.constant 0 : i32
    %c0_i32_0 = arith.constant 0 : i32
    return %arg0, %c0_i32 : i32, i32
  }
  func.func @transform_1(%arg0: i32) -> (i32, i32) {
    %c0_i32 = arith.constant 0 : i32
    %c0_i32_0 = arith.constant 0 : i32
    %c0_i32_1 = arith.constant 0 : i32
    return %c0_i32, %c0_i32_0 : i32, i32
  }
  func.func @transform_2(%arg0: i32) -> (i32, i32) {
    %c0_i32 = arith.constant 0 : i32
    %c0_i32_0 = arith.constant 0 : i32
    %c0_i32_1 = arith.constant 0 : i32
    return %c0_i32, %c0_i32_0 : i32, i32
  }
  func.func @transform_3(%arg0: i32) -> (i32, i32) {
    %c0_i32 = arith.constant 0 : i32
    %c0_i32_0 = arith.constant 0 : i32
    %c0_i32_1 = arith.constant 0 : i32
    return %c0_i32, %c0_i32_0 : i32, i32
  }
  func.func @transform_4(%arg0: i32) -> (i32, i32) {
    %c0_i32 = arith.constant 0 : i32
    %c0_i32_0 = arith.constant 0 : i32
    %c0_i32_1 = arith.constant 0 : i32
    return %c0_i32, %c0_i32_0 : i32, i32
  }
  func.func @transform_5(%arg0: i32) -> (i32, i32) {
    %c0_i32 = arith.constant 0 : i32
    %c0_i32_0 = arith.constant 0 : i32
    return %arg0, %c0_i32 : i32, i32
  }
}

</mosaic_0001>

<llo_original>
// kernel: dense_classifier_forward.1
$region0: #{dense_classifier_forward.1}
  #allocation0 [shape = 'u32[]', space=smem, size = 0x4, offset = 0x4, fixed_abs, tag = 'smem constant byte address 0x4 - core index']
  #allocation1 [shape = 'u32[144,128]{1,0:T(1,128)}', space=vmem, size = 0x12000, scoped, tag = 'internal scratch']
  %s0 = inlined_call_operand.vmem [shape: bf16[8,768], index: 0, kind: input, shape index: {}]
  %s1 = inlined_call_operand.vmem [shape: bf16[768,256], index: 1, kind: input, shape index: {}]
  %s2 = inlined_call_operand.vmem [shape: f32[1,256], index: 2, kind: input, shape index: {}]
  %s3 = inlined_call_operand.vmem [shape: bf16[256,128], index: 3, kind: input, shape index: {}]
  %s4 = inlined_call_operand.vmem [shape: f32[1,128], index: 4, kind: input, shape index: {}]
  %s5 = inlined_call_operand.hbm [shape: f32[8,128], index: 5, kind: output, shape index: {}]
  %s6 = sld [smem:[#allocation0]]
  $region30: #{dense_classifier_forward.1} parent=0
    _
  %s8 = ssub.s32 1, %s6
  %s9 = scalar_select 0, %s8, %s6
  $region1: #{dense_classifier_forward.1} parent=0
    #allocation2 [shape = 'u8[4096]{0}', space=vmem, size = 0x1000, scoped, tag = 'output window, operand 0, single buffered']
    #allocation3 [shape = 's32[1]{0}', space=sflag, size = 0x4, scoped, tag = 'scoped memory for dense_classifier_forward.1']
    %10 = vsyncpa [#allocation3], 0
    // Predicated region
    $region2: #{dense_classifier_forward.1} parent=1 // pred_check
      _
    $region3: #{dense_classifier_forward.1} parent=1 // pred_check_branch
      %12 = sbr.rel (0) target = $region5
    $region4: #{dense_classifier_forward.1} parent=1 // pred_region
      _
    $region5: #{dense_classifier_forward.1} parent=1 // pred_fallthru
      _
    // Predicated region
    $region6: #{dense_classifier_forward.1} parent=1 // pred_check
      _
    $region7: #{dense_classifier_forward.1} parent=1 // pred_check_branch
      %14 = sbr.rel (0) target = $region9
    $region8: #{dense_classifier_forward.1} parent=1 // pred_region
      _
    $region9: #{dense_classifier_forward.1} parent=1 // pred_fallthru
      _
    // Predicated region
    $region10: #{dense_classifier_forward.1} parent=1 // pred_check
      _
    $region11: #{dense_classifier_forward.1} parent=1 // pred_check_branch
      %16 = sbr.rel (0) target = $region13
    $region12: #{dense_classifier_forward.1} parent=1 // pred_region
      _
    $region13: #{dense_classifier_forward.1} parent=1 // pred_fallthru
      _
    // Predicated region
    $region14: #{dense_classifier_forward.1} parent=1 // pred_check
      _
    $region15: #{dense_classifier_forward.1} parent=1 // pred_check_branch
      %18 = sbr.rel (0) target = $region17
    $region16: #{dense_classifier_forward.1} parent=1 // pred_region
      _
    $region17: #{dense_classifier_forward.1} parent=1 // pred_fallthru
      _
    // Predicated region
    $region18: #{dense_classifier_forward.1} parent=1 // pred_check
      _
    $region19: #{dense_classifier_forward.1} parent=1 // pred_check_branch
      %20 = sbr.rel (0) target = $region21
    $region20: #{dense_classifier_forward.1} parent=1 // pred_region
      _
    $region21: #{dense_classifier_forward.1} parent=1 // pred_fallthru
      _
    %v22 = vld [vmem:[%s0] sm:$0xff]
    %v23 = vld [vmem:[%s0 + $0x8] sm:$0xff]
    %v24 = vld [vmem:[%s0 + $0x10] sm:$0xff]
    %v25 = vld [vmem:[%s1] sm:$0xff]
    %v26 = vld [vmem:[%s1 + $0x8] sm:$0xff]
    %v27 = vld [vmem:[%s1 + $0x10] sm:$0xff]
    %v28 = vld [vmem:[%s1 + $0x18] sm:$0xff]
    %v29 = vld [vmem:[%s1 + $0x20] sm:$0xff]
    %v30 = vld [vmem:[%s1 + $0x28] sm:$0xff]
    %v31 = vld [vmem:[%s1 + $0x30] sm:$0xff]
    %v32 = vld [vmem:[%s1 + $0x38] sm:$0xff]
    %v33 = vld [vmem:[%s1 + $0x40] sm:$0xff]
    %v34 = vld [vmem:[%s1 + $0x48] sm:$0xff]
    %v35 = vld [vmem:[%s1 + $0x50] sm:$0xff]
    %v36 = vld [vmem:[%s1 + $0x58] sm:$0xff]
    %v37 = vld [vmem:[%s1 + $0x60] sm:$0xff]
    %v38 = vld [vmem:[%s1 + $0x68] sm:$0xff]
    %v39 = vld [vmem:[%s1 + $0x70] sm:$0xff]
    %v40 = vld [vmem:[%s1 + $0x78] sm:$0xff]
    %v41 = vld [vmem:[%s1 + $0x80] sm:$0xff]
    %v42 = vld [vmem:[%s1 + $0x88] sm:$0xff]
    %v43 = vld [vmem:[%s1 + $0x90] sm:$0xff]
    %v44 = vld [vmem:[%s1 + $0x98] sm:$0xff]
    %v45 = vld [vmem:[%s1 + $0xa0] sm:$0xff]
    %v46 = vld [vmem:[%s1 + $0xa8] sm:$0xff]
    %v47 = vld [vmem:[%s1 + $0xb0] sm:$0xff]
    %v48 = vld [vmem:[%s1 + $0xb8] sm:$0xff]
    %v49 = vld [vmem:[%s1 + $0xc0] sm:$0xff]
    %v50 = vld [vmem:[%s1 + $0xc8] sm:$0xff]
    %v51 = vld [vmem:[%s1 + $0xd0] sm:$0xff]
    %v52 = vld [vmem:[%s1 + $0xd8] sm:$0xff]
    %v53 = vld [vmem:[%s1 + $0xe0] sm:$0xff]
    %v54 = vld [vmem:[%s1 + $0xe8] sm:$0xff]
    %v55 = vld [vmem:[%s1 + $0xf0] sm:$0xff]
    %v56 = vld [vmem:[%s1 + $0xf8] sm:$0xff]
    %v57 = vld [vmem:[%s1 + $0x100] sm:$0xff]
    %v58 = vld [vmem:[%s1 + $0x108] sm:$0xff]
    %v59 = vld [vmem:[%s1 + $0x110] sm:$0xff]
    %v60 = vld [vmem:[%s1 + $0x118] sm:$0xff]
    %v61 = vld [vmem:[%s1 + $0x120] sm:$0xff]
    %v62 = vld [vmem:[%s1 + $0x128] sm:$0xff]
    %v63 = vld [vmem:[%s1 + $0x130] sm:$0xff]
    %v64 = vld [vmem:[%s1 + $0x138] sm:$0xff]
    %v65 = vld [vmem:[%s1 + $0x140] sm:$0xff]
    %v66 = vld [vmem:[%s1 + $0x148] sm:$0xff]
    %v67 = vld [vmem:[%s1 + $0x150] sm:$0xff]
    %v68 = vld [vmem:[%s1 + $0x158] sm:$0xff]
    %v69 = vld [vmem:[%s1 + $0x160] sm:$0xff]
    %v70 = vld [vmem:[%s1 + $0x168] sm:$0xff]
    %v71 = vld [vmem:[%s1 + $0x170] sm:$0xff]
    %v72 = vld [vmem:[%s1 + $0x178] sm:$0xff]
    %v73 = vld [vmem:[%s1 + $0x180] sm:$0xff]
    %v74 = vld [vmem:[%s1 + $0x188] sm:$0xff]
    %v75 = vld [vmem:[%s1 + $0x190] sm:$0xff]
    %v76 = vld [vmem:[%s1 + $0x198] sm:$0xff]
    %v77 = vld [vmem:[%s1 + $0x1a0] sm:$0xff]
    %v78 = vld [vmem:[%s1 + $0x1a8] sm:$0xff]
    %v79 = vld [vmem:[%s1 + $0x1b0] sm:$0xff]
    %v80 = vld [vmem:[%s1 + $0x1b8] sm:$0xff]
    %v81 = vld [vmem:[%s1 + $0x1c0] sm:$0xff]
    %v82 = vld [vmem:[%s1 + $0x1c8] sm:$0xff]
    %v83 = vld [vmem:[%s1 + $0x1d0] sm:$0xff]
    %v84 = vld [vmem:[%s1 + $0x1d8] sm:$0xff]
    %v85 = vld [vmem:[%s1 + $0x1e0] sm:$0xff]
    %v86 = vld [vmem:[%s1 + $0x1e8] sm:$0xff]
    %v87 = vld [vmem:[%s1 + $0x1f0] sm:$0xff]
    %v88 = vld [vmem:[%s1 + $0x1f8] sm:$0xff]
    %v89 = vld [vmem:[%s1 + $0x200] sm:$0xff]
    %v90 = vld [vmem:[%s1 + $0x208] sm:$0xff]
    %v91 = vld [vmem:[%s1 + $0x210] sm:$0xff]
    %v92 = vld [vmem:[%s1 + $0x218] sm:$0xff]
    %v93 = vld [vmem:[%s1 + $0x220] sm:$0xff]
    %v94 = vld [vmem:[%s1 + $0x228] sm:$0xff]
    %v95 = vld [vmem:[%s1 + $0x230] sm:$0xff]
    %v96 = vld [vmem:[%s1 + $0x238] sm:$0xff]
    %v97 = vld [vmem:[%s1 + $0x240] sm:$0xff]
    %v98 = vld [vmem:[%s1 + $0x248] sm:$0xff]
    %v99 = vld [vmem:[%s1 + $0x250] sm:$0xff]
    %v100 = vld [vmem:[%s1 + $0x258] sm:$0xff]
    %v101 = vld [vmem:[%s1 + $0x260] sm:$0xff]
    %v102 = vld [vmem:[%s1 + $0x268] sm:$0xff]
    %v103 = vld [vmem:[%s1 + $0x270] sm:$0xff]
    %v104 = vld [vmem:[%s1 + $0x278] sm:$0xff]
    %v105 = vld [vmem:[%s1 + $0x280] sm:$0xff]
    %v106 = vld [vmem:[%s1 + $0x288] sm:$0xff]
    %v107 = vld [vmem:[%s1 + $0x290] sm:$0xff]
    %v108 = vld [vmem:[%s1 + $0x298] sm:$0xff]
    %v109 = vld [vmem:[%s1 + $0x2a0] sm:$0xff]
    %v110 = vld [vmem:[%s1 + $0x2a8] sm:$0xff]
    %v111 = vld [vmem:[%s1 + $0x2b0] sm:$0xff]
    %v112 = vld [vmem:[%s1 + $0x2b8] sm:$0xff]
    %v113 = vld [vmem:[%s1 + $0x2c0] sm:$0xff]
    %v114 = vld [vmem:[%s1 + $0x2c8] sm:$0xff]
    %v115 = vld [vmem:[%s1 + $0x2d0] sm:$0xff]
    %v116 = vld [vmem:[%s1 + $0x2d8] sm:$0xff]
    %v117 = vld [vmem:[%s1 + $0x2e0] sm:$0xff]
    %v118 = vld [vmem:[%s1 + $0x2e8] sm:$0xff]
    %v119 = vld [vmem:[%s1 + $0x2f0] sm:$0xff]
    %v120 = vld [vmem:[%s1 + $0x2f8] sm:$0xff]
    %v121 = vld [vmem:[%s2] sm:$0x3]
    %v123 = vlaneseq
    %v124 = vshrl.u32 %v123, 7
    %v125 = vsub.s32 0, %v124
    %v126 = vrot.slane %v121, %v125
    %v127 = vlaneseq
    %v128 = vshrl.u32 %v127, 7
    %v129 = vsub.s32 1, %v128
    %v130 = vrot.slane %v121, %v129
    %v136 = vunpack.c.l.b16 %v22
    %v137 = vunpack.c.h.b16 %v22
    %v138 = vunpack.c.l.b16 %v23
    %v139 = vunpack.c.h.b16 %v23
    %v140 = vunpack.c.l.b16 %v24
    %v141 = vunpack.c.h.b16 %v24
    %v142 = vpack.c.b16 %v136, %v136
    %v143 = vpack.c.b16 %v137, %v137
    %v144 = vpack.c.b16 %v138, %v138
    %v145 = vpack.c.b16 %v139, %v139
    %v146 = vpack.c.b16 %v140, %v140
    %v147 = vpack.c.b16 %v141, %v141
    %v250 = vunpack.c.l.b16 %v25
    %v251 = vunpack.c.h.b16 %v25
    %v252 = vunpack.c.l.b16 %v26
    %v253 = vunpack.c.h.b16 %v26
    %v254 = vunpack.c.l.b16 %v27
    %v255 = vunpack.c.h.b16 %v27
    %v256 = vunpack.c.l.b16 %v28
    %v257 = vunpack.c.h.b16 %v28
    %v258 = vunpack.c.l.b16 %v29
    %v259 = vunpack.c.h.b16 %v29
    %v260 = vunpack.c.l.b16 %v30
    %v261 = vunpack.c.h.b16 %v30
    %v262 = vunpack.c.l.b16 %v31
    %v263 = vunpack.c.h.b16 %v31
    %v264 = vunpack.c.l.b16 %v32
    %v265 = vunpack.c.h.b16 %v32
    %v266 = vunpack.c.l.b16 %v33
    %v267 = vunpack.c.h.b16 %v33
    %v268 = vunpack.c.l.b16 %v34
    %v269 = vunpack.c.h.b16 %v34
    %v270 = vunpack.c.l.b16 %v35
    %v271 = vunpack.c.h.b16 %v35
    %v272 = vunpack.c.l.b16 %v36
    %v273 = vunpack.c.h.b16 %v36
    %v274 = vunpack.c.l.b16 %v37
    %v275 = vunpack.c.h.b16 %v37
    %v276 = vunpack.c.l.b16 %v38
    %v277 = vunpack.c.h.b16 %v38
    %v278 = vunpack.c.l.b16 %v39
    %v279 = vunpack.c.h.b16 %v39
    %v280 = vunpack.c.l.b16 %v40
    %v281 = vunpack.c.h.b16 %v40
    %v282 = vunpack.c.l.b16 %v41
    %v283 = vunpack.c.h.b16 %v41
    %v284 = vunpack.c.l.b16 %v42
    %v285 = vunpack.c.h.b16 %v42
    %v286 = vunpack.c.l.b16 %v43
    %v287 = vunpack.c.h.b16 %v43
    %v288 = vunpack.c.l.b16 %v44
    %v289 = vunpack.c.h.b16 %v44
    %v290 = vunpack.c.l.b16 %v45
    %v291 = vunpack.c.h.b16 %v45
    %v292 = vunpack.c.l.b16 %v46
    %v293 = vunpack.c.h.b16 %v46
    %v294 = vunpack.c.l.b16 %v47
    %v295 = vunpack.c.h.b16 %v47
    %v296 = vunpack.c.l.b16 %v48
    %v297 = vunpack.c.h.b16 %v48
    %v298 = vunpack.c.l.b16 %v49
    %v299 = vunpack.c.h.b16 %v49
    %v300 = vunpack.c.l.b16 %v50
    %v301 = vunpack.c.h.b16 %v50
    %v302 = vunpack.c.l.b16 %v51
    %v303 = vunpack.c.h.b16 %v51
    %v304 = vunpack.c.l.b16 %v52
    %v305 = vunpack.c.h.b16 %v52
    %v306 = vunpack.c.l.b16 %v53
    %v307 = vunpack.c.h.b16 %v53
    %v308 = vunpack.c.l.b16 %v54
    %v309 = vunpack.c.h.b16 %v54
    %v310 = vunpack.c.l.b16 %v55
    %v311 = vunpack.c.h.b16 %v55
    %v312 = vunpack.c.l.b16 %v56
    %v313 = vunpack.c.h.b16 %v56
    %v314 = vunpack.c.l.b16 %v57
    %v315 = vunpack.c.h.b16 %v57
    %v316 = vunpack.c.l.b16 %v58
    %v317 = vunpack.c.h.b16 %v58
    %v318 = vunpack.c.l.b16 %v59
    %v319 = vunpack.c.h.b16 %v59
    %v320 = vunpack.c.l.b16 %v60
    %v321 = vunpack.c.h.b16 %v60
    %v322 = vunpack.c.l.b16 %v61
    %v323 = vunpack.c.h.b16 %v61
    %v324 = vunpack.c.l.b16 %v62
    %v325 = vunpack.c.h.b16 %v62
    %v326 = vunpack.c.l.b16 %v63
    %v327 = vunpack.c.h.b16 %v63
    %v328 = vunpack.c.l.b16 %v64
    %v329 = vunpack.c.h.b16 %v64
    %v330 = vunpack.c.l.b16 %v65
    %v331 = vunpack.c.h.b16 %v65
    %v332 = vunpack.c.l.b16 %v66
    %v333 = vunpack.c.h.b16 %v66
    %v334 = vunpack.c.l.b16 %v67
    %v335 = vunpack.c.h.b16 %v67
    %v336 = vunpack.c.l.b16 %v68
    %v337 = vunpack.c.h.b16 %v68
    %v338 = vunpack.c.l.b16 %v69
    %v339 = vunpack.c.h.b16 %v69
    %v340 = vunpack.c.l.b16 %v70
    %v341 = vunpack.c.h.b16 %v70
    %v342 = vunpack.c.l.b16 %v71
    %v343 = vunpack.c.h.b16 %v71
    %v344 = vunpack.c.l.b16 %v72
    %v345 = vunpack.c.h.b16 %v72
    %v346 = vunpack.c.l.b16 %v73
    %v347 = vunpack.c.h.b16 %v73
    %v348 = vunpack.c.l.b16 %v74
    %v349 = vunpack.c.h.b16 %v74
    %v350 = vunpack.c.l.b16 %v75
    %v351 = vunpack.c.h.b16 %v75
    %v352 = vunpack.c.l.b16 %v76
    %v353 = vunpack.c.h.b16 %v76
    %v354 = vunpack.c.l.b16 %v77
    %v355 = vunpack.c.h.b16 %v77
    %v356 = vunpack.c.l.b16 %v78
    %v357 = vunpack.c.h.b16 %v78
    %v358 = vunpack.c.l.b16 %v79
    %v359 = vunpack.c.h.b16 %v79
    %v360 = vunpack.c.l.b16 %v80
    %v361 = vunpack.c.h.b16 %v80
    %v362 = vunpack.c.l.b16 %v81
    %v363 = vunpack.c.h.b16 %v81
    %v364 = vunpack.c.l.b16 %v82
    %v365 = vunpack.c.h.b16 %v82
    %v366 = vunpack.c.l.b16 %v83
    %v367 = vunpack.c.h.b16 %v83
    %v368 = vunpack.c.l.b16 %v84
    %v369 = vunpack.c.h.b16 %v84
    %v370 = vunpack.c.l.b16 %v85
    %v371 = vunpack.c.h.b16 %v85
    %v372 = vunpack.c.l.b16 %v86
    %v373 = vunpack.c.h.b16 %v86
    %v374 = vunpack.c.l.b16 %v87
    %v375 = vunpack.c.h.b16 %v87
    %v376 = vunpack.c.l.b16 %v88
    %v377 = vunpack.c.h.b16 %v88
    %v378 = vunpack.c.l.b16 %v89
    %v379 = vunpack.c.h.b16 %v89
    %v380 = vunpack.c.l.b16 %v90
    %v381 = vunpack.c.h.b16 %v90
    %v382 = vunpack.c.l.b16 %v91
    %v383 = vunpack.c.h.b16 %v91
    %v384 = vunpack.c.l.b16 %v92
    %v385 = vunpack.c.h.b16 %v92
    %v386 = vunpack.c.l.b16 %v93
    %v387 = vunpack.c.h.b16 %v93
    %v388 = vunpack.c.l.b16 %v94
    %v389 = vunpack.c.h.b16 %v94
    %v390 = vunpack.c.l.b16 %v95
    %v391 = vunpack.c.h.b16 %v95
    %v392 = vunpack.c.l.b16 %v96
    %v393 = vunpack.c.h.b16 %v96
    %v394 = vunpack.c.l.b16 %v97
    %v395 = vunpack.c.h.b16 %v97
    %v396 = vunpack.c.l.b16 %v98
    %v397 = vunpack.c.h.b16 %v98
    %v398 = vunpack.c.l.b16 %v99
    %v399 = vunpack.c.h.b16 %v99
    %v400 = vunpack.c.l.b16 %v100
    %v401 = vunpack.c.h.b16 %v100
    %v402 = vunpack.c.l.b16 %v101
    %v403 = vunpack.c.h.b16 %v101
    %v404 = vunpack.c.l.b16 %v102
    %v405 = vunpack.c.h.b16 %v102
    %v406 = vunpack.c.l.b16 %v103
    %v407 = vunpack.c.h.b16 %v103
    %v408 = vunpack.c.l.b16 %v104
    %v409 = vunpack.c.h.b16 %v104
    %v410 = vunpack.c.l.b16 %v105
    %v411 = vunpack.c.h.b16 %v105
    %v412 = vunpack.c.l.b16 %v106
    %v413 = vunpack.c.h.b16 %v106
    %v414 = vunpack.c.l.b16 %v107
    %v415 = vunpack.c.h.b16 %v107
    %v416 = vunpack.c.l.b16 %v108
    %v417 = vunpack.c.h.b16 %v108
    %v418 = vunpack.c.l.b16 %v109
    %v419 = vunpack.c.h.b16 %v109
    %v420 = vunpack.c.l.b16 %v110
    %v421 = vunpack.c.h.b16 %v110
    %v422 = vunpack.c.l.b16 %v111
    %v423 = vunpack.c.h.b16 %v111
    %v424 = vunpack.c.l.b16 %v112
    %v425 = vunpack.c.h.b16 %v112
    %v426 = vunpack.c.l.b16 %v113
    %v427 = vunpack.c.h.b16 %v113
    %v428 = vunpack.c.l.b16 %v114
    %v429 = vunpack.c.h.b16 %v114
    %v430 = vunpack.c.l.b16 %v115
    %v431 = vunpack.c.h.b16 %v115
    %v432 = vunpack.c.l.b16 %v116
    %v433 = vunpack.c.h.b16 %v116
    %v434 = vunpack.c.l.b16 %v117
    %v435 = vunpack.c.h.b16 %v117
    %v436 = vunpack.c.l.b16 %v118
    %v437 = vunpack.c.h.b16 %v118
    %v438 = vunpack.c.l.b16 %v119
    %v439 = vunpack.c.h.b16 %v119
    %v440 = vunpack.c.l.b16 %v120
    %v441 = vunpack.c.h.b16 %v120
    %v442 = vpack.c.b16 %v252, %v250
    %v443 = vpack.c.b16 %v253, %v251
    %v444 = vpack.c.b16 %v256, %v254
    %v445 = vpack.c.b16 %v257, %v255
    %v446 = vpack.c.b16 %v260, %v258
    %v447 = vpack.c.b16 %v261, %v259
    %v448 = vpack.c.b16 %v264, %v262
    %v449 = vpack.c.b16 %v265, %v263
    %v450 = vpack.c.b16 %v268, %v266
    %v451 = vpack.c.b16 %v269, %v267
    %v452 = vpack.c.b16 %v272, %v270
    %v453 = vpack.c.b16 %v273, %v271
    %v454 = vpack.c.b16 %v276, %v274
    %v455 = vpack.c.b16 %v277, %v275
    %v456 = vpack.c.b16 %v280, %v278
    %v457 = vpack.c.b16 %v281, %v279
    %v458 = vpack.c.b16 %v284, %v282
    %v459 = vpack.c.b16 %v285, %v283
    %v460 = vpack.c.b16 %v288, %v286
    %v461 = vpack.c.b16 %v289, %v287
    %v462 = vpack.c.b16 %v292, %v290
    %v463 = vpack.c.b16 %v293, %v291
    %v464 = vpack.c.b16 %v296, %v294
    %v465 = vpack.c.b16 %v297, %v295
    %v466 = vpack.c.b16 %v300, %v298
    %v467 = vpack.c.b16 %v301, %v299
    %v468 = vpack.c.b16 %v304, %v302
    %v469 = vpack.c.b16 %v305, %v303
    %v470 = vpack.c.b16 %v308, %v306
    %v471 = vpack.c.b16 %v309, %v307
    %v472 = vpack.c.b16 %v312, %v310
    %v473 = vpack.c.b16 %v313, %v311
    %v474 = vpack.c.b16 %v316, %v314
    %v475 = vpack.c.b16 %v317, %v315
    %v476 = vpack.c.b16 %v320, %v318
    %v477 = vpack.c.b16 %v321, %v319
    %v478 = vpack.c.b16 %v324, %v322
    %v479 = vpack.c.b16 %v325, %v323
    %v480 = vpack.c.b16 %v328, %v326
    %v481 = vpack.c.b16 %v329, %v327
    %v482 = vpack.c.b16 %v332, %v330
    %v483 = vpack.c.b16 %v333, %v331
    %v484 = vpack.c.b16 %v336, %v334
    %v485 = vpack.c.b16 %v337, %v335
    %v486 = vpack.c.b16 %v340, %v338
    %v487 = vpack.c.b16 %v341, %v339
    %v488 = vpack.c.b16 %v344, %v342
    %v489 = vpack.c.b16 %v345, %v343
    %v490 = vpack.c.b16 %v348, %v346
    %v491 = vpack.c.b16 %v349, %v347
    %v492 = vpack.c.b16 %v352, %v350
    %v493 = vpack.c.b16 %v353, %v351
    %v494 = vpack.c.b16 %v356, %v354
    %v495 = vpack.c.b16 %v357, %v355
    %v496 = vpack.c.b16 %v360, %v358
    %v497 = vpack.c.b16 %v361, %v359
    %v498 = vpack.c.b16 %v364, %v362
    %v499 = vpack.c.b16 %v365, %v363
    %v500 = vpack.c.b16 %v368, %v366
    %v501 = vpack.c.b16 %v369, %v367
    %v502 = vpack.c.b16 %v372, %v370
    %v503 = vpack.c.b16 %v373, %v371
    %v504 = vpack.c.b16 %v376, %v374
    %v505 = vpack.c.b16 %v377, %v375
    %v506 = vpack.c.b16 %v380, %v378
    %v507 = vpack.c.b16 %v381, %v379
    %v508 = vpack.c.b16 %v384, %v382
    %v509 = vpack.c.b16 %v385, %v383
    %v510 = vpack.c.b16 %v388, %v386
    %v511 = vpack.c.b16 %v389, %v387
    %v512 = vpack.c.b16 %v392, %v390
    %v513 = vpack.c.b16 %v393, %v391
    %v514 = vpack.c.b16 %v396, %v394
    %v515 = vpack.c.b16 %v397, %v395
    %v516 = vpack.c.b16 %v400, %v398
    %v517 = vpack.c.b16 %v401, %v399
    %v518 = vpack.c.b16 %v404, %v402
    %v519 = vpack.c.b16 %v405, %v403
    %v520 = vpack.c.b16 %v408, %v406
    %v521 = vpack.c.b16 %v409, %v407
    %v522 = vpack.c.b16 %v412, %v410
    %v523 = vpack.c.b16 %v413, %v411
    %v524 = vpack.c.b16 %v416, %v414
    %v525 = vpack.c.b16 %v417, %v415
    %v526 = vpack.c.b16 %v420, %v418
    %v527 = vpack.c.b16 %v421, %v419
    %v528 = vpack.c.b16 %v424, %v422
    %v529 = vpack.c.b16 %v425, %v423
    %v530 = vpack.c.b16 %v428, %v426
    %v531 = vpack.c.b16 %v429, %v427
    %v532 = vpack.c.b16 %v432, %v430
    %v533 = vpack.c.b16 %v433, %v431
    %v534 = vpack.c.b16 %v436, %v434
    %v535 = vpack.c.b16 %v437, %v435
    %v536 = vpack.c.b16 %v440, %v438
    %v537 = vpack.c.b16 %v441, %v439
    %634 = vmatprep.subr.bf16.mxu0 %v443
    %635 = vmatpush1.bf16.msra.mxu0 %v442
    %636 = vmatprep.subr.bf16.mxu0 %v445
    %637 = vmatpush1.bf16.msra.mxu0 %v444
    %638 = vmatprep.subr.bf16.mxu0 %v447
    %639 = vmatpush1.bf16.msra.mxu0 %v446
    %640 = vmatprep.subr.bf16.mxu0 %v449
    %641 = vmatpush1.bf16.msra.mxu0 %v448
    %642 = vmatprep.subr.bf16.mxu0 %v451
    %643 = vmatpush1.bf16.msra.mxu0 %v450
    %644 = vmatprep.subr.bf16.mxu0 %v453
    %645 = vmatpush1.bf16.msra.mxu0 %v452
    %646 = vmatprep.subr.bf16.mxu0 %v455
    %647 = vmatpush1.bf16.msra.mxu0 %v454
    %648 = vmatprep.subr.bf16.mxu0 %v457
    %649 = vmatpush1.bf16.msra.mxu0 %v456
    %650 = vmatprep.subr.bf16.mxu0 %v459
    %651 = vmatpush1.bf16.msra.mxu0 %v458
    %652 = vmatprep.subr.bf16.mxu0 %v461
    %653 = vmatpush1.bf16.msra.mxu0 %v460
    %654 = vmatprep.subr.bf16.mxu0 %v463
    %655 = vmatpush1.bf16.msra.mxu0 %v462
    %656 = vmatprep.subr.bf16.mxu0 %v465
    %657 = vmatpush1.bf16.msra.mxu0 %v464
    %658 = vmatprep.subr.bf16.mxu0 %v467
    %659 = vmatpush1.bf16.msra.mxu0 %v466
    %660 = vmatprep.subr.bf16.mxu0 %v469
    %661 = vmatpush1.bf16.msra.mxu0 %v468
    %662 = vmatprep.subr.bf16.mxu0 %v471
    %663 = vmatpush1.bf16.msra.mxu0 %v470
    %664 = vmatprep.subr.bf16.mxu0 %v473
    %665 = vmatpush1.bf16.msra.mxu0 %v472
    %666 = vmatprep.mubr.bf16.mxu0 %v143
    %667 = vmatmul.mubr.bf16.gmra.mrb[0].mxu0 %v142
    %v668 = vpop.f32.mrb[0].mxu0
    %v669 = vadd.f32 %v126, %v668
    %v670 = vpop.f32.mrb[0].mxu0
    %v671 = vadd.f32 %v130, %v670
    %v672 = vpop.f32.mrb[0].mxu0
    %v673 = vpop.f32.mrb[0].mxu0
    %674 = vdwg.mxu0
    %675 = vmatprep.subr.bf16.mxu0 %v475
    %676 = vmatpush1.bf16.msra.mxu0 %v474
    %677 = vmatprep.subr.bf16.mxu0 %v477
    %678 = vmatpush1.bf16.msra.mxu0 %v476
    %679 = vmatprep.subr.bf16.mxu0 %v479
    %680 = vmatpush1.bf16.msra.mxu0 %v478
    %681 = vmatprep.subr.bf16.mxu0 %v481
    %682 = vmatpush1.bf16.msra.mxu0 %v480
    %683 = vmatprep.subr.bf16.mxu0 %v483
    %684 = vmatpush1.bf16.msra.mxu0 %v482
    %685 = vmatprep.subr.bf16.mxu0 %v485
    %686 = vmatpush1.bf16.msra.mxu0 %v484
    %687 = vmatprep.subr.bf16.mxu0 %v487
    %688 = vmatpush1.bf16.msra.mxu0 %v486
    %689 = vmatprep.subr.bf16.mxu0 %v489
    %690 = vmatpush1.bf16.msra.mxu0 %v488
    %691 = vmatprep.subr.bf16.mxu0 %v491
    %692 = vmatpush1.bf16.msra.mxu0 %v490
    %693 = vmatprep.subr.bf16.mxu0 %v493
    %694 = vmatpush1.bf16.msra.mxu0 %v492
    %695 = vmatprep.subr.bf16.mxu0 %v495
    %696 = vmatpush1.bf16.msra.mxu0 %v494
    %697 = vmatprep.subr.bf16.mxu0 %v497
    %698 = vmatpush1.bf16.msra.mxu0 %v496
    %699 = vmatprep.subr.bf16.mxu0 %v499
    %700 = vmatpush1.bf16.msra.mxu0 %v498
    %701 = vmatprep.subr.bf16.mxu0 %v501
    %702 = vmatpush1.bf16.msra.mxu0 %v500
    %703 = vmatprep.subr.bf16.mxu0 %v503
    %704 = vmatpush1.bf16.msra.mxu0 %v502
    %705 = vmatprep.subr.bf16.mxu0 %v505
    %706 = vmatpush1.bf16.msra.mxu0 %v504
    %707 = vmatprep.mubr.bf16.mxu0 %v145
    %708 = vmatmul.mubr.bf16.gmra.mrb[0].mxu0 %v144
    %v709 = vpop.f32.mrb[0].mxu0
    %v710 = vadd.f32 %v669, %v709
    %v711 = vpop.f32.mrb[0].mxu0
    %v712 = vadd.f32 %v671, %v711
    %v713 = vpop.f32.mrb[0].mxu0
    %v714 = vpop.f32.mrb[0].mxu0
    %715 = vdwg.mxu0
    %716 = vmatprep.subr.bf16.mxu0 %v507
    %717 = vmatpush1.bf16.msra.mxu0 %v506
    %718 = vmatprep.subr.bf16.mxu0 %v509
    %719 = vmatpush1.bf16.msra.mxu0 %v508
    %720 = vmatprep.subr.bf16.mxu0 %v511
    %721 = vmatpush1.bf16.msra.mxu0 %v510
    %722 = vmatprep.subr.bf16.mxu0 %v513
    %723 = vmatpush1.bf16.msra.mxu0 %v512
    %724 = vmatprep.subr.bf16.mxu0 %v515
    %725 = vmatpush1.bf16.msra.mxu0 %v514
    %726 = vmatprep.subr.bf16.mxu0 %v517
    %727 = vmatpush1.bf16.msra.mxu0 %v516
    %728 = vmatprep.subr.bf16.mxu0 %v519
    %729 = vmatpush1.bf16.msra.mxu0 %v518
    %730 = vmatprep.subr.bf16.mxu0 %v521
    %731 = vmatpush1.bf16.msra.mxu0 %v520
    %732 = vmatprep.subr.bf16.mxu0 %v523
    %733 = vmatpush1.bf16.msra.mxu0 %v522
    %734 = vmatprep.subr.bf16.mxu0 %v525
    %735 = vmatpush1.bf16.msra.mxu0 %v524
    %736 = vmatprep.subr.bf16.mxu0 %v527
    %737 = vmatpush1.bf16.msra.mxu0 %v526
    %738 = vmatprep.subr.bf16.mxu0 %v529
    %739 = vmatpush1.bf16.msra.mxu0 %v528
    %740 = vmatprep.subr.bf16.mxu0 %v531
    %741 = vmatpush1.bf16.msra.mxu0 %v530
    %742 = vmatprep.subr.bf16.mxu0 %v533
    %743 = vmatpush1.bf16.msra.mxu0 %v532
    %744 = vmatprep.subr.bf16.mxu0 %v535
    %745 = vmatpush1.bf16.msra.mxu0 %v534
    %746 = vmatprep.subr.bf16.mxu0 %v537
    %747 = vmatpush1.bf16.msra.mxu0 %v536
    %748 = vmatprep.mubr.bf16.mxu0 %v147
    %749 = vmatmul.mubr.bf16.gmra.mrb[0].mxu0 %v146
    %v750 = vpop.f32.mrb[0].mxu0
    %v751 = vadd.f32 %v710, %v750
    %v752 = vpop.f32.mrb[0].mxu0
    %v753 = vadd.f32 %v712, %v752
    %v754 = vpop.f32.mrb[0].mxu0
    %v755 = vpop.f32.mrb[0].mxu0
    %756 = vdwg.mxu0
    %v757 = vmax.f32 %v751, 0.0
    %v758 = vmax.f32 %v753, 0.0
    %v759 = vpack.c.bf16 %v757, %v757
    %v760 = vpack.c.bf16 %v758, %v758
    %v761 = vld [vmem:[%s3] sm:$0xf]
    %v762 = vld [vmem:[%s3 + $0x4] sm:$0xf]
    %v763 = vld [vmem:[%s3 + $0x8] sm:$0xf]
    %v764 = vld [vmem:[%s3 + $0xc] sm:$0xf]
    %v765 = vld [vmem:[%s3 + $0x10] sm:$0xf]
    %v766 = vld [vmem:[%s3 + $0x14] sm:$0xf]
    %v767 = vld [vmem:[%s3 + $0x18] sm:$0xf]
    %v768 = vld [vmem:[%s3 + $0x1c] sm:$0xf]
    %v769 = vld [vmem:[%s3 + $0x20] sm:$0xf]
    %v770 = vld [vmem:[%s3 + $0x24] sm:$0xf]
    %v771 = vld [vmem:[%s3 + $0x28] sm:$0xf]
    %v772 = vld [vmem:[%s3 + $0x2c] sm:$0xf]
    %v773 = vld [vmem:[%s3 + $0x30] sm:$0xf]
    %v774 = vld [vmem:[%s3 + $0x34] sm:$0xf]
    %v775 = vld [vmem:[%s3 + $0x38] sm:$0xf]
    %v776 = vld [vmem:[%s3 + $0x3c] sm:$0xf]
    %v777 = vld [vmem:[%s3 + $0x40] sm:$0xf]
    %v778 = vld [vmem:[%s3 + $0x44] sm:$0xf]
    %v779 = vld [vmem:[%s3 + $0x48] sm:$0xf]
    %v780 = vld [vmem:[%s3 + $0x4c] sm:$0xf]
    %v781 = vld [vmem:[%s3 + $0x50] sm:$0xf]
    %v782 = vld [vmem:[%s3 + $0x54] sm:$0xf]
    %v783 = vld [vmem:[%s3 + $0x58] sm:$0xf]
    %v784 = vld [vmem:[%s3 + $0x5c] sm:$0xf]
    %v785 = vld [vmem:[%s3 + $0x60] sm:$0xf]
    %v786 = vld [vmem:[%s3 + $0x64] sm:$0xf]
    %v787 = vld [vmem:[%s3 + $0x68] sm:$0xf]
    %v788 = vld [vmem:[%s3 + $0x6c] sm:$0xf]
    %v789 = vld [vmem:[%s3 + $0x70] sm:$0xf]
    %v790 = vld [vmem:[%s3 + $0x74] sm:$0xf]
    %v791 = vld [vmem:[%s3 + $0x78] sm:$0xf]
    %v792 = vld [vmem:[%s3 + $0x7c] sm:$0xf]
    %v793 = vld [vmem:[%s4] sm:$0x1]
    %v795 = vlaneseq
    %v796 = vshrl.u32 %v795, 7
    %v797 = vsub.s32 0, %v796
    %v798 = vrot.slane %v793, %v797
    %v832 = vunpack.c.l.b16 %v761
    %v833 = vunpack.c.l.b16 %v762
    %v834 = vunpack.c.l.b16 %v763
    %v835 = vunpack.c.l.b16 %v764
    %v836 = vunpack.c.l.b16 %v765
    %v837 = vunpack.c.l.b16 %v766
    %v838 = vunpack.c.l.b16 %v767
    %v839 = vunpack.c.l.b16 %v768
    %v840 = vunpack.c.l.b16 %v769
    %v841 = vunpack.c.l.b16 %v770
    %v842 = vunpack.c.l.b16 %v771
    %v843 = vunpack.c.l.b16 %v772
    %v844 = vunpack.c.l.b16 %v773
    %v845 = vunpack.c.l.b16 %v774
    %v846 = vunpack.c.l.b16 %v775
    %v847 = vunpack.c.l.b16 %v776
    %v848 = vunpack.c.l.b16 %v777
    %v849 = vunpack.c.l.b16 %v778
    %v850 = vunpack.c.l.b16 %v779
    %v851 = vunpack.c.l.b16 %v780
    %v852 = vunpack.c.l.b16 %v781
    %v853 = vunpack.c.l.b16 %v782
    %v854 = vunpack.c.l.b16 %v783
    %v855 = vunpack.c.l.b16 %v784
    %v856 = vunpack.c.l.b16 %v785
    %v857 = vunpack.c.l.b16 %v786
    %v858 = vunpack.c.l.b16 %v787
    %v859 = vunpack.c.l.b16 %v788
    %v860 = vunpack.c.l.b16 %v789
    %v861 = vunpack.c.l.b16 %v790
    %v862 = vunpack.c.l.b16 %v791
    %v863 = vunpack.c.l.b16 %v792
    %v864 = vpack.c.b16 %v833, %v832
    %v865 = vpack.c.b16 %v835, %v834
    %v866 = vpack.c.b16 %v837, %v836
    %v867 = vpack.c.b16 %v839, %v838
    %v868 = vpack.c.b16 %v841, %v840
    %v869 = vpack.c.b16 %v843, %v842
    %v870 = vpack.c.b16 %v845, %v844
    %v871 = vpack.c.b16 %v847, %v846
    %v872 = vpack.c.b16 %v849, %v848
    %v873 = vpack.c.b16 %v851, %v850
    %v874 = vpack.c.b16 %v853, %v852
    %v875 = vpack.c.b16 %v855, %v854
    %v876 = vpack.c.b16 %v857, %v856
    %v877 = vpack.c.b16 %v859, %v858
    %v878 = vpack.c.b16 %v861, %v860
    %v879 = vpack.c.b16 %v863, %v862
    %896 = vmatprep.subr.bf16.mxu0 0
    %897 = vmatpush1.bf16.msra.mxu0 %v864
    %898 = vmatprep.subr.bf16.mxu0 0
    %899 = vmatpush1.bf16.msra.mxu0 %v865
    %900 = vmatprep.subr.bf16.mxu0 0
    %901 = vmatpush1.bf16.msra.mxu0 %v866
    %902 = vmatprep.subr.bf16.mxu0 0
    %903 = vmatpush1.bf16.msra.mxu0 %v867
    %904 = vmatprep.subr.bf16.mxu0 0
    %905 = vmatpush1.bf16.msra.mxu0 %v868
    %906 = vmatprep.subr.bf16.mxu0 0
    %907 = vmatpush1.bf16.msra.mxu0 %v869
    %908 = vmatprep.subr.bf16.mxu0 0
    %909 = vmatpush1.bf16.msra.mxu0 %v870
    %910 = vmatprep.subr.bf16.mxu0 0
    %911 = vmatpush1.bf16.msra.mxu0 %v871
    %912 = vmatprep.subr.bf16.mxu0 0
    %913 = vmatpush1.bf16.msra.mxu0 %v872
    %914 = vmatprep.subr.bf16.mxu0 0
    %915 = vmatpush1.bf16.msra.mxu0 %v873
    %916 = vmatprep.subr.bf16.mxu0 0
    %917 = vmatpush1.bf16.msra.mxu0 %v874
    %918 = vmatprep.subr.bf16.mxu0 0
    %919 = vmatpush1.bf16.msra.mxu0 %v875
    %920 = vmatprep.subr.bf16.mxu0 0
    %921 = vmatpush1.bf16.msra.mxu0 %v876
    %922 = vmatprep.subr.bf16.mxu0 0
    %923 = vmatpush1.bf16.msra.mxu0 %v877
    %924 = vmatprep.subr.bf16.mxu0 0
    %925 = vmatpush1.bf16.msra.mxu0 %v878
    %926 = vmatprep.subr.bf16.mxu0 0
    %927 = vmatpush1.bf16.msra.mxu0 %v879
    %928 = vmatprep.mubr.bf16.mxu0 %v760
    %929 = vmatmul.mubr.bf16.gmra.mrb[0].mxu0 %v759
    %v930 = vpop.f32.mrb[0].mxu0
    %v931 = vadd.f32 %v798, %v930
    %v932 = vpop.f32.mrb[0].mxu0
    %v933 = vpop.f32.mrb[0].mxu0
    %v934 = vpop.f32.mrb[0].mxu0
    %935 = vdwg.mxu0
    %936 = vst [vmem:[#allocation2] sm:$0xff] %v931
    // Predicated region
    $region22: #{dense_classifier_forward.1} parent=1 // pred_check
      _
    $region23: #{dense_classifier_forward.1} parent=1 // pred_check_branch
      %938 = sbr.rel (0) target = $region25
    $region24: #{dense_classifier_forward.1} parent=1 // pred_region
      %s940 = ssub.s32 128, 128
      %941 = vsyncadd [#allocation3], %s940
      %s943 = sshll.u32 [#allocation2], 4
      %s944 = int_to_ptr.vmem [resolvable:$true] %s943
      %946 = dma.vmem_to_hbm [thread:$0]  %s944, 128, %s5, [#allocation3]
    $region25: #{dense_classifier_forward.1} parent=1 // pred_fallthru
      _
    // Predicated region
    $region26: #{dense_classifier_forward.1} parent=1 // pred_check
      _
    $region27: #{dense_classifier_forward.1} parent=1 // pred_check_branch
      %948 = sbr.rel (0) target = $region29
    $region28: #{dense_classifier_forward.1} parent=1 // pred_region
      %949 = dma.done [#allocation3], 128
    $region29: #{dense_classifier_forward.1} parent=1 // pred_fallthru
      _
    %950 = vsyncpa [#allocation3], 1

</llo_original>
